<compile_context>
chip_gen: v5e
topology: v5e:2x2
jax: 0.10.0
libtpu: 0.0.40
codegen_flags: <defaults>
</compile_context>

<pallas_src>
import jax
import jax.numpy as jnp
from jax.experimental import pallas as pl
from jax.experimental.pallas import tpu as pltpu


# ---------------------------------------------------------------------------
# Kernel
# ---------------------------------------------------------------------------
def _linear_sigmoid_kernel(z_ref, w_ref, b_ref, o_ref, acc_ref):
    # z_ref:   (tile_b, tile_k)  activation dtype (cast to W dtype in-kernel)
    # w_ref:   (tile_k, tile_n)  bf16, pre-transposed [D_in, D_out] layout
    # b_ref:   (1, tile_n)       f32
    # o_ref:   (tile_b, tile_n)  out dtype
    # acc_ref: (tile_b, tile_n)  f32 scratch accumulator (lives across K steps)
    k = pl.program_id(2)

    @pl.when(k == 0)
    def _():
        acc_ref[...] = jnp.zeros_like(acc_ref)

    z = z_ref[...].astype(w_ref.dtype)
    acc_ref[...] += jnp.dot(z, w_ref[...], preferred_element_type=jnp.float32)

    @pl.when(k == pl.num_programs(2) - 1)
    def _():
        logits = acc_ref[...] + b_ref[...]
        o_ref[...] = jax.nn.sigmoid(logits).astype(o_ref.dtype)


# ---------------------------------------------------------------------------
# One-time parameter preparation (fold into stored model state)
# ---------------------------------------------------------------------------
def prepare_params(weight, bias, *, param_dtype=jnp.bfloat16):
    """weight: [D_out, D_in] (PyTorch nn.Linear layout), bias: [D_out].

    Returns (w_t, b_row): w_t = weight.T as [D_in, D_out] in the MXU feed
    dtype, b_row = bias as f32 [1, D_out].  Call once and store with the
    model; the forward pass then does zero per-call weight copies.
    """
    w_t = jnp.asarray(weight).T.astype(param_dtype)            # [D_in, D_out]
    b_row = jnp.asarray(bias).astype(jnp.float32).reshape(1, -1)  # [1, D_out]
    return w_t, b_row


# ---------------------------------------------------------------------------
# Tile selection (generation-aware)
# ---------------------------------------------------------------------------
def _vmem_capacity_bytes():
    try:
        cap = getattr(pltpu.get_tpu_info(), "vmem_capacity_bytes", None)
        if cap:
            return int(cap)
    except Exception:
        pass
    return 64 * 1024 * 1024  # conservative default: v7x per-TensorCore VMEM


def _choose_tiles(B, D_in, D_out, z_itemsize, w_itemsize, o_itemsize, budget):
    # --- K (contraction) tiling: bound per-step bytes for large D_in.
    if D_in <= 4096:
        tile_k = D_in
    else:
        tile_k = D_in
        for cand in (4096, 2048, 1024, 512, 256, 128):
            if D_in % cand == 0:
                tile_k = cand
                break
        # TODO(synk): for huge D_in that is not a multiple of 128, zero-pad K
        # once in prepare_params (ragged-K garbage would corrupt real outputs).
    n_k = pl.cdiv(D_in, tile_k)

    def fits(tb, tn, nn):
        w_bufs = 1 if (nn == 1 and n_k == 1) else 2
        use = (2 * tb * tile_k * z_itemsize          # z tiles (double-buffered)
               + w_bufs * tile_k * tn * w_itemsize   # weight tile(s)
               + w_bufs * tn * 4                     # bias tile(s)
               + 2 * tb * tn * o_itemsize            # output tiles
               + tb * tn * 4                         # f32 accumulator scratch
               + 2 * tb * tn * 4)                    # f32 epilogue temporaries
        return use <= budget

    b_cap = 1024 if budget >= (60 << 20) else 512    # bigger tiles on 128MiB chips
    tile_b = B if B <= b_cap else b_cap

    # Prefer keeping the whole D_out resident (n_n == 1): no W re-streaming,
    # no per-N-tile step overhead, and no output padding/slicing at all.
    candidates = [D_out] + [c for c in (4096, 2048, 1024, 512, 256, 128)
                            if c < D_out]
    tile_n = None
    for c in candidates:
        if fits(tile_b, c, pl.cdiv(D_out, c)):
            tile_n = c
            break
    if tile_n is None:
        tile_n = 128
        while tile_b > 8 and not fits(tile_b, tile_n, pl.cdiv(D_out, tile_n)):
            tile_b = max(8, (tile_b // 2) & ~7)
    return tile_b, tile_n, tile_k, n_k


# ---------------------------------------------------------------------------
# Forward pass
# ---------------------------------------------------------------------------
def probability_layer_sigmoid(z, w_t, b_row, *, out_dtype=None):
    """forward(z) = sigmoid(z @ W^T + b).

    z:     [B, D_in]
    w_t:   [D_in, D_out]  pre-transposed / pre-cast weight (prepare_params)
    b_row: [1, D_out]     f32 bias
    """
    B, D_in = z.shape
    d_in_w, D_out = w_t.shape
    assert d_in_w == D_in, "weight/activation D_in mismatch"
    if out_dtype is None:
        # NOTE: pass out_dtype=jnp.bfloat16 to halve output HBM write traffic
        # if the downstream Bernoulli likelihood tolerates it.
        out_dtype = z.dtype

    z_sz = jnp.dtype(z.dtype).itemsize
    w_sz = jnp.dtype(w_t.dtype).itemsize
    o_sz = jnp.dtype(out_dtype).itemsize

    vmem_cap = _vmem_capacity_bytes()
    budget = int(vmem_cap * 0.6)          # headroom for Mosaic internals
    tile_b, tile_n, tile_k, n_k = _choose_tiles(
        B, D_in, D_out, z_sz, w_sz, o_sz, budget)

    n_b = pl.cdiv(B, tile_b)
    n_n = pl.cdiv(D_out, tile_n)

    # Weight / bias blocks fully grid-invariant -> single-buffer them.
    pm = ({"pipeline_mode": pl.Buffered(1)}
          if (n_n == 1 and n_k == 1) else {})

    cost = pl.CostEstimate(
        flops=2 * B * D_in * D_out,
        transcendentals=B * D_out,
        bytes_accessed=(B * D_in * z_sz + D_in * D_out * w_sz
                        + D_out * 4 + B * D_out * o_sz),
    )

    # Grid order: (D_out, batch, K).  K innermost drives the accumulator;
    # batch inside D_out keeps each weight tile resident across batch tiles.
    return pl.pallas_call(
        _linear_sigmoid_kernel,
        out_shape=jax.ShapeDtypeStruct((B, D_out), out_dtype),
        grid_spec=pltpu.PrefetchScalarGridSpec(
            num_scalar_prefetch=0,
            grid=(n_n, n_b, n_k),
            in_specs=[
                pl.BlockSpec((tile_b, tile_k), lambda j, i, k: (i, k)),
                pl.BlockSpec((tile_k, tile_n), lambda j, i, k: (k, j), **pm),
                pl.BlockSpec((1, tile_n), lambda j, i, k: (0, j), **pm),
            ],
            out_specs=pl.BlockSpec((tile_b, tile_n), lambda j, i, k: (i, j)),
            scratch_shapes=[pltpu.VMEM((tile_b, tile_n), jnp.float32)],
        ),
        compiler_params=pltpu.CompilerParams(
            dimension_semantics=("parallel", "parallel", "arbitrary"),
            vmem_limit_bytes=int(vmem_cap * 0.8),
        ),
        cost_estimate=cost,
    )(z, w_t, b_row)


# ---------------------------------------------------------------------------
# Demo / correctness check
# ---------------------------------------------------------------------------
if __name__ == "__main__":
    # Small MNIST-like decoder head: latent z [B, 32] -> Bernoulli probs [B, 784].
    B, D_IN, D_OUT = 8, 32, 784

    key = jax.random.PRNGKey(0)
    kz, kw, kb = jax.random.split(key, 3)

    bound = 1.0 / (D_IN ** 0.5)   # mimic nn.Linear's default uniform init scale
    weight = jax.random.uniform(kw, (D_OUT, D_IN), jnp.float32, -bound, bound)
    bias = jax.random.uniform(kb, (D_OUT,), jnp.float32, -bound, bound)
    z = jax.random.normal(kz, (B, D_IN), jnp.float32)

    # One-time parameter prep (stored with the model, NOT per forward call).
    w_t, b_row = prepare_params(weight, bias)

    out = probability_layer_sigmoid(z, w_t, b_row)
    out = jax.block_until_ready(out)

    # Reference: plain f32 JAX, same math as torch nn.Linear + nn.Sigmoid.
    ref = jax.nn.sigmoid(z @ weight.T + bias)
    assert out.shape == (B, D_OUT) and out.dtype == z.dtype
    max_err = float(jnp.max(jnp.abs(out - ref)))
    assert jnp.allclose(out, ref, atol=2e-2, rtol=2e-2), max_err

    print("KERNEL_OK")
</pallas_src>

<mosaic_0001>
module attributes {stable_mosaic.version = 11 : i64} {
  func.func @_linear_sigmoid_kernel(%arg0: i32, %arg1: i32, %arg2: i32, %arg3: memref<8x32xf32, #tpu.memory_space<vmem>>, %arg4: memref<32x784xbf16, #tpu.memory_space<vmem>>, %arg5: memref<1x784xf32, #tpu.memory_space<vmem>>, %arg6: memref<8x784xf32, #tpu.memory_space<vmem>>, %arg7: memref<8x784xf32, #tpu.memory_space<vmem>>) attributes {dimension_semantics = [#tpu.dimension_semantics<parallel>, #tpu.dimension_semantics<parallel>, #tpu.dimension_semantics<arbitrary>], iteration_bounds = array<i64: 1, 1, 1>, scalar_prefetch = 0 : i64, scratch_operands = 1 : i64, tpu.core_type = #tpu.core_type<tc>, window_params = [{transform_indices = @transform_0, window_bounds = array<i64: 8, 32>}, {pipeline_mode = #tpu.pipeline_mode<synchronous>, transform_indices = @transform_1, window_bounds = array<i64: 32, 784>}, {pipeline_mode = #tpu.pipeline_mode<synchronous>, transform_indices = @transform_2, window_bounds = array<i64: 1, 784>}, {transform_indices = @transform_3, window_bounds = array<i64: 8, 784>}]} {
    %c0_i32 = arith.constant 0 : i32
    %0 = arith.cmpi eq, %arg2, %c0_i32 : i32
    %1 = arith.extui %0 : i1 to i32
    %c0_i32_0 = arith.constant 0 : i32
    %2 = arith.cmpi ne, %1, %c0_i32_0 : i32
    scf.if %2 {
      %cst_10 = arith.constant 0.000000e+00 : f32
      %13 = vector.broadcast %cst_10 : f32 to vector<8x784xf32>
      %c0_11 = arith.constant 0 : index
      %c0_12 = arith.constant 0 : index
      %14 = vector.load %arg7[%c0_11, %c0_12] : memref<8x784xf32, #tpu.memory_space<vmem>>, vector<8x784xf32>
      tpu.vector_store %arg7[%c0_11, %c0_12], %13 {strides = array<i32>} : memref<8x784xf32, #tpu.memory_space<vmem>>, vector<8x784xf32>,
    } else {
    }
    %c0 = arith.constant 0 : index
    %c0_1 = arith.constant 0 : index
    %3 = vector.load %arg3[%c0, %c0_1] : memref<8x32xf32, #tpu.memory_space<vmem>>, vector<8x32xf32>
    %4 = arith.truncf %3 : vector<8x32xf32> to vector<8x32xbf16>
    %c0_2 = arith.constant 0 : index
    %c0_3 = arith.constant 0 : index
    %5 = vector.load %arg7[%c0_2, %c0_3] : memref<8x784xf32, #tpu.memory_space<vmem>>, vector<8x784xf32>
    %c0_4 = arith.constant 0 : index
    %c0_5 = arith.constant 0 : index
    %6 = vector.load %arg4[%c0_4, %c0_5] : memref<32x784xbf16, #tpu.memory_space<vmem>>, vector<32x784xbf16>
    %cst = arith.constant dense<0.000000e+00> : vector<8x784xf32>
    %7 = tpu.matmul %4, %6, %cst {dimension_numbers = #tpu.dot_dimension_numbers<[1], [0], [0], [1], [0, 0, 1, 1], [], []>} : vector<8x32xbf16>, vector<32x784xbf16>, vector<8x784xf32> -> vector<8x784xf32>
    %8 = arith.addf %5, %7 : vector<8x784xf32>
    %c0_6 = arith.constant 0 : index
    %c0_7 = arith.constant 0 : index
    %9 = vector.load %arg7[%c0_6, %c0_7] : memref<8x784xf32, #tpu.memory_space<vmem>>, vector<8x784xf32>
    tpu.vector_store %arg7[%c0_6, %c0_7], %8 {strides = array<i32>} : memref<8x784xf32, #tpu.memory_space<vmem>>, vector<8x784xf32>,
    %c0_i32_8 = arith.constant 0 : i32
    %10 = arith.cmpi eq, %arg2, %c0_i32_8 : i32
    %11 = arith.extui %10 : i1 to i32
    %c0_i32_9 = arith.constant 0 : i32
    %12 = arith.cmpi ne, %11, %c0_i32_9 : i32
    scf.if %12 {
      %c0_10 = arith.constant 0 : index
      %c0_11 = arith.constant 0 : index
      %13 = vector.load %arg7[%c0_10, %c0_11] : memref<8x784xf32, #tpu.memory_space<vmem>>, vector<8x784xf32>
      %c0_12 = arith.constant 0 : index
      %c0_13 = arith.constant 0 : index
      %14 = vector.load %arg5[%c0_12, %c0_13] : memref<1x784xf32, #tpu.memory_space<vmem>>, vector<1x784xf32>
      %15 = vector.broadcast %14 : vector<1x784xf32> to vector<8x784xf32>
      %16 = arith.addf %13, %15 : vector<8x784xf32>
      %17 = arith.negf %16 : vector<8x784xf32>
      %18 = math.exp %17 : vector<8x784xf32>
      %cst_14 = arith.constant 1.000000e+00 : f32
      %19 = vector.broadcast %cst_14 : f32 to vector<8x784xf32>
      %20 = arith.addf %19, %18 : vector<8x784xf32>
      %21 = arith.divf %19, %20 : vector<8x784xf32>
      %c0_15 = arith.constant 0 : index
      %c0_16 = arith.constant 0 : index
      %22 = vector.load %arg6[%c0_15, %c0_16] : memref<8x784xf32, #tpu.memory_space<vmem>>, vector<8x784xf32>
      tpu.vector_store %arg6[%c0_15, %c0_16], %21 {strides = array<i32>} : memref<8x784xf32, #tpu.memory_space<vmem>>, vector<8x784xf32>,
    } else {
    }
    return
  }
  func.func @transform_0(%arg0: i32, %arg1: i32, %arg2: i32) -> (i32, i32) {
    %c0_i32 = arith.constant 0 : i32
    return %arg1, %arg2 : i32, i32
  }
  func.func @transform_1(%arg0: i32, %arg1: i32, %arg2: i32) -> (i32, i32) {
    %c0_i32 = arith.constant 0 : i32
    return %arg2, %arg0 : i32, i32
  }
  func.func @transform_2(%arg0: i32, %arg1: i32, %arg2: i32) -> (i32, i32) {
    %c0_i32 = arith.constant 0 : i32
    %c0_i32_0 = arith.constant 0 : i32
    return %c0_i32, %arg0 : i32, i32
  }
  func.func @transform_3(%arg0: i32, %arg1: i32, %arg2: i32) -> (i32, i32) {
    %c0_i32 = arith.constant 0 : i32
    return %arg1, %arg0 : i32, i32
  }
}

</mosaic_0001>

<llo_original>
// kernel: tpu_custom_call.1
$region0: #{tpu_custom_call.1}
  #allocation0 [shape = 'u32[]', space=smem, size = 0x4, offset = 0x4, fixed_abs, tag = 'smem constant byte address 0x4 - core index']
  #allocation1 [shape = 'u32[72,128]{1,0:T(1,128)}', space=vmem, size = 0x9000, scoped, tag = 'internal scratch']
  #allocation2 [shape = 'f32[8,784]{1,0:T(8,128)}', space=vmem, size = 0x7000, scoped, tag = 'scratch operand']
  %s0 = inlined_call_operand.hbm [shape: f32[8,32], index: 0, kind: input, shape index: {}]
  %s1 = inlined_call_operand.hbm [shape: bf16[32,784], index: 1, kind: input, shape index: {}]
  %s2 = inlined_call_operand.hbm [shape: f32[1,784], index: 2, kind: input, shape index: {}]
  %s3 = inlined_call_operand.hbm [shape: f32[8,784], index: 3, kind: output, shape index: {}]
  %s4 = sld [smem:[#allocation0]]
  $region42: #{tpu_custom_call.1} parent=0
    _
  %s6 = ssub.s32 1, %s4
  %s7 = scalar_select 0, %s6, %s4
  $region1: #{tpu_custom_call.1} parent=0
    #allocation3 [shape = 'u8[4096]{0}', space=vmem, size = 0x1000, scoped, tag = 'input window, operand 0, single buffered']
    #allocation4 [shape = 's32[1]{0}', space=sflag, size = 0x4, scoped, tag = 'scoped memory for tpu_custom_call.1']
    #allocation5 [shape = 's32[1]{0}', space=sflag, size = 0x4, scoped, tag = 'scoped memory for tpu_custom_call.1']
    #allocation6 [shape = 'u8[57344]{0}', space=vmem, size = 0xe000, scoped, tag = 'input window, operand 1, single buffered']
    #allocation7 [shape = 's32[1]{0}', space=sflag, size = 0x4, scoped, tag = 'scoped memory for tpu_custom_call.1']
    #allocation8 [shape = 'u8[3584]{0}', space=vmem, size = 0x1000, scoped, tag = 'input window, operand 2, single buffered']
    #allocation9 [shape = 'u8[28672]{0}', space=vmem, size = 0x7000, scoped, tag = 'output window, operand 0, single buffered']
    %8 = vsyncpa [#allocation4], 0
    %9 = vsyncpa [#allocation7], 0
    %10 = vsyncpa [#allocation5], 0
    // Predicated region
    $region2: #{tpu_custom_call.1} parent=1 // pred_check
      _
    $region3: #{tpu_custom_call.1} parent=1 // pred_check_branch
      %12 = sbr.rel (0) target = $region5
    $region4: #{tpu_custom_call.1} parent=1 // pred_region
      %14 = vsyncadd [#allocation4], 0
      %s16 = sshll.u32 %s0, 4
      %s17 = int_to_ptr.hbm [resolvable:$true] %s16
      %s18 = sshll.u32 [#allocation3], 4
      %s19 = int_to_ptr.vmem [resolvable:$true] %s18
      %21 = dma.hbm_to_vmem [thread:$0]  %s17, 128, %s19, [#allocation4]
    $region5: #{tpu_custom_call.1} parent=1 // pred_fallthru
      _
    // Predicated region
    $region6: #{tpu_custom_call.1} parent=1 // pred_check
      _
    $region7: #{tpu_custom_call.1} parent=1 // pred_check_branch
      %23 = sbr.rel (0) target = $region9
    $region8: #{tpu_custom_call.1} parent=1 // pred_region
      %25 = vsyncadd [#allocation7], 0
      %s26 = sshll.u32 %s1, 4
      %s27 = int_to_ptr.hbm [resolvable:$true] %s26
      %s28 = sshll.u32 [#allocation6], 4
      %s29 = int_to_ptr.vmem [resolvable:$true] %s28
      %34 = dma.hbm_to_vmem [thread:$0]  %s27, 1792, %s29, [#allocation7], 448, 448, 28
    $region9: #{tpu_custom_call.1} parent=1 // pred_fallthru
      _
    // Predicated region
    $region10: #{tpu_custom_call.1} parent=1 // pred_check
      _
    $region11: #{tpu_custom_call.1} parent=1 // pred_check_branch
      %36 = sbr.rel (0) target = $region13
    $region12: #{tpu_custom_call.1} parent=1 // pred_region
      %38 = vsyncadd [#allocation7], 0
      %s40 = sshll.u32 %s2, 4
      %s41 = int_to_ptr.hbm [resolvable:$true] %s40
      %s42 = sshll.u32 [#allocation8], 4
      %s43 = int_to_ptr.vmem [resolvable:$true] %s42
      %45 = dma.hbm_to_vmem [thread:$0]  %s41, 112, %s43, [#allocation7]
    $region13: #{tpu_custom_call.1} parent=1 // pred_fallthru
      _
    // Predicated region
    $region14: #{tpu_custom_call.1} parent=1 // pred_check
      _
    $region15: #{tpu_custom_call.1} parent=1 // pred_check_branch
      %47 = sbr.rel (0) target = $region17
    $region16: #{tpu_custom_call.1} parent=1 // pred_region
      %49 = dma.done [#allocation4], 128
    $region17: #{tpu_custom_call.1} parent=1 // pred_fallthru
      _
    // Predicated region
    $region18: #{tpu_custom_call.1} parent=1 // pred_check
      _
    $region19: #{tpu_custom_call.1} parent=1 // pred_check_branch
      %51 = sbr.rel (0) target = $region21
    $region20: #{tpu_custom_call.1} parent=1 // pred_region
      %53 = dma.done [#allocation7], 1792
    $region21: #{tpu_custom_call.1} parent=1 // pred_fallthru
      _
    // Predicated region
    $region22: #{tpu_custom_call.1} parent=1 // pred_check
      _
    $region23: #{tpu_custom_call.1} parent=1 // pred_check_branch
      %55 = sbr.rel (0) target = $region25
    $region24: #{tpu_custom_call.1} parent=1 // pred_region
      %57 = dma.done [#allocation7], 112
    $region25: #{tpu_custom_call.1} parent=1 // pred_fallthru
      _
    %p59 = scmp.eq.s32.totalorder 0, 0
    // Predicated region
    $region26: #{tpu_custom_call.1} parent=1 // pred_check
      %p60 = pneg %p59
    $region27: #{tpu_custom_call.1} parent=1 // pred_check_branch
      %62 = sbr.rel (%p60) target = $region29
    $region28: #{tpu_custom_call.1} parent=1 // pred_region
      %63 = vst [vmem:[#allocation2] sm:$0xff] 0.0
      %64 = vst [vmem:[#allocation2 + $0x8] sm:$0xff] 0.0
      %65 = vst [vmem:[#allocation2 + $0x10] sm:$0xff] 0.0
      %66 = vst [vmem:[#allocation2 + $0x18] sm:$0xff] 0.0
      %67 = vst [vmem:[#allocation2 + $0x20] sm:$0xff] 0.0
      %68 = vst [vmem:[#allocation2 + $0x28] sm:$0xff] 0.0
      %vm69 = vcmask 130048
      %70 = vst.msk [vmem:[#allocation2 + $0x30] sm:$0xff] %vm69, 0.0
    $region29: #{tpu_custom_call.1} parent=1 // pred_fallthru
      _
    %v71 = vld [vmem:[#allocation3] sm:$0xff]
    %v72 = vpack.c.bf16 %v71, %v71
    %v73 = vld [vmem:[#allocation2] sm:$0xff]
    %v74 = vld [vmem:[#allocation2 + $0x8] sm:$0xff]
    %v75 = vld [vmem:[#allocation2 + $0x10] sm:$0xff]
    %v76 = vld [vmem:[#allocation2 + $0x18] sm:$0xff]
    %v77 = vld [vmem:[#allocation2 + $0x20] sm:$0xff]
    %v78 = vld [vmem:[#allocation2 + $0x28] sm:$0xff]
    %v79 = vld [vmem:[#allocation2 + $0x30] sm:$0xff]
    %v80 = vld [vmem:[#allocation6] sm:$0xff]
    %v81 = vld [vmem:[#allocation6 + $0x8] sm:$0xff]
    %v82 = vld [vmem:[#allocation6 + $0x10] sm:$0xff]
    %v83 = vld [vmem:[#allocation6 + $0x18] sm:$0xf]
    %v84 = vld [vmem:[#allocation6 + $0x1c] sm:$0xff]
    %v85 = vld [vmem:[#allocation6 + $0x24] sm:$0xff]
    %v86 = vld [vmem:[#allocation6 + $0x2c] sm:$0xff]
    %v87 = vld [vmem:[#allocation6 + $0x34] sm:$0xf]
    %v88 = vld [vmem:[#allocation6 + $0x38] sm:$0xff]
    %v89 = vld [vmem:[#allocation6 + $0x40] sm:$0xff]
    %v90 = vld [vmem:[#allocation6 + $0x48] sm:$0xff]
    %v91 = vld [vmem:[#allocation6 + $0x50] sm:$0xf]
    %v92 = vld [vmem:[#allocation6 + $0x54] sm:$0xff]
    %v93 = vld [vmem:[#allocation6 + $0x5c] sm:$0xff]
    %v94 = vld [vmem:[#allocation6 + $0x64] sm:$0xff]
    %v95 = vld [vmem:[#allocation6 + $0x6c] sm:$0xf]
    %v112 = vunpack.c.l.b16 %v80
    %v113 = vunpack.c.h.b16 %v80
    %v114 = vunpack.c.l.b16 %v81
    %v115 = vunpack.c.h.b16 %v81
    %v116 = vunpack.c.l.b16 %v82
    %v117 = vunpack.c.h.b16 %v82
    %v118 = vunpack.c.l.b16 %v83
    %v119 = vunpack.c.l.b16 %v84
    %v120 = vunpack.c.h.b16 %v84
    %v121 = vunpack.c.l.b16 %v85
    %v122 = vunpack.c.h.b16 %v85
    %v123 = vunpack.c.l.b16 %v86
    %v124 = vunpack.c.h.b16 %v86
    %v125 = vunpack.c.l.b16 %v87
    %v126 = vunpack.c.l.b16 %v88
    %v127 = vunpack.c.h.b16 %v88
    %v128 = vunpack.c.l.b16 %v89
    %v129 = vunpack.c.h.b16 %v89
    %v130 = vunpack.c.l.b16 %v90
    %v131 = vunpack.c.h.b16 %v90
    %v132 = vunpack.c.l.b16 %v91
    %v133 = vunpack.c.l.b16 %v92
    %v134 = vunpack.c.h.b16 %v92
    %v135 = vunpack.c.l.b16 %v93
    %v136 = vunpack.c.h.b16 %v93
    %v137 = vunpack.c.l.b16 %v94
    %v138 = vunpack.c.h.b16 %v94
    %v139 = vunpack.c.l.b16 %v95
    %v140 = vpack.c.b16 %v119, %v112
    %v141 = vpack.c.b16 %v120, %v113
    %v142 = vpack.c.b16 %v121, %v114
    %v143 = vpack.c.b16 %v122, %v115
    %v144 = vpack.c.b16 %v123, %v116
    %v145 = vpack.c.b16 %v124, %v117
    %v146 = vpack.c.b16 %v125, %v118
    %v147 = vpack.c.b16 %v133, %v126
    %v148 = vpack.c.b16 %v134, %v127
    %v149 = vpack.c.b16 %v135, %v128
    %v150 = vpack.c.b16 %v136, %v129
    %v151 = vpack.c.b16 %v137, %v130
    %v152 = vpack.c.b16 %v138, %v131
    %v153 = vpack.c.b16 %v139, %v132
    %vm168 = vcmask 261120
    %v170 = vsel %vm168, %v72, 0
    %172 = vmatpush.bf16.msra.mxu0 0
    %173 = vmatpush.bf16.msra.mxu0 0
    %174 = vmatpush.bf16.msra.mxu0 0
    %175 = vmatpush.bf16.msra.mxu0 0
    %176 = vmatpush.bf16.msra.mxu0 0
    %177 = vmatpush.bf16.msra.mxu0 0
    %178 = vmatpush.bf16.msra.mxu0 %v147
    %179 = vmatpush.bf16.msra.mxu0 %v140
    %180 = vmatmul.bf16.gmra.mxu0 %v170
    %v181 = vpop.f32.mrf.mxu0
    %v182 = vadd.f32 0.0, %v181
    %v183 = vpop.f32.mrf.mxu0
    %184 = vdwg.mxu0
    %185 = vmatpush.bf16.msra.mxu0 0
    %186 = vmatpush.bf16.msra.mxu0 0
    %187 = vmatpush.bf16.msra.mxu0 0
    %188 = vmatpush.bf16.msra.mxu0 0
    %189 = vmatpush.bf16.msra.mxu0 0
    %190 = vmatpush.bf16.msra.mxu0 0
    %191 = vmatpush.bf16.msra.mxu0 %v148
    %192 = vmatpush.bf16.msra.mxu0 %v141
    %193 = vmatmul.bf16.gmra.mxu0 %v170
    %v194 = vpop.f32.mrf.mxu0
    %v195 = vadd.f32 0.0, %v194
    %v196 = vpop.f32.mrf.mxu0
    %197 = vdwg.mxu0
    %198 = vmatpush.bf16.msra.mxu0 0
    %199 = vmatpush.bf16.msra.mxu0 0
    %200 = vmatpush.bf16.msra.mxu0 0
    %201 = vmatpush.bf16.msra.mxu0 0
    %202 = vmatpush.bf16.msra.mxu0 0
    %203 = vmatpush.bf16.msra.mxu0 0
    %204 = vmatpush.bf16.msra.mxu0 %v149
    %205 = vmatpush.bf16.msra.mxu0 %v142
    %206 = vmatmul.bf16.gmra.mxu0 %v170
    %v207 = vpop.f32.mrf.mxu0
    %v208 = vadd.f32 0.0, %v207
    %v209 = vpop.f32.mrf.mxu0
    %210 = vdwg.mxu0
    %211 = vmatpush.bf16.msra.mxu0 0
    %212 = vmatpush.bf16.msra.mxu0 0
    %213 = vmatpush.bf16.msra.mxu0 0
    %214 = vmatpush.bf16.msra.mxu0 0
    %215 = vmatpush.bf16.msra.mxu0 0
    %216 = vmatpush.bf16.msra.mxu0 0
    %217 = vmatpush.bf16.msra.mxu0 %v150
    %218 = vmatpush.bf16.msra.mxu0 %v143
    %219 = vmatmul.bf16.gmra.mxu0 %v170
    %v220 = vpop.f32.mrf.mxu0
    %v221 = vadd.f32 0.0, %v220
    %v222 = vpop.f32.mrf.mxu0
    %223 = vdwg.mxu0
    %224 = vmatpush.bf16.msra.mxu0 0
    %225 = vmatpush.bf16.msra.mxu0 0
    %226 = vmatpush.bf16.msra.mxu0 0
    %227 = vmatpush.bf16.msra.mxu0 0
    %228 = vmatpush.bf16.msra.mxu0 0
    %229 = vmatpush.bf16.msra.mxu0 0
    %230 = vmatpush.bf16.msra.mxu0 %v151
    %231 = vmatpush.bf16.msra.mxu0 %v144
    %232 = vmatmul.bf16.gmra.mxu0 %v170
    %v233 = vpop.f32.mrf.mxu0
    %v234 = vadd.f32 0.0, %v233
    %v235 = vpop.f32.mrf.mxu0
    %236 = vdwg.mxu0
    %237 = vmatpush.bf16.msra.mxu0 0
    %238 = vmatpush.bf16.msra.mxu0 0
    %239 = vmatpush.bf16.msra.mxu0 0
    %240 = vmatpush.bf16.msra.mxu0 0
    %241 = vmatpush.bf16.msra.mxu0 0
    %242 = vmatpush.bf16.msra.mxu0 0
    %243 = vmatpush.bf16.msra.mxu0 %v152
    %244 = vmatpush.bf16.msra.mxu0 %v145
    %245 = vmatmul.bf16.gmra.mxu0 %v170
    %v246 = vpop.f32.mrf.mxu0
    %v247 = vadd.f32 0.0, %v246
    %v248 = vpop.f32.mrf.mxu0
    %249 = vdwg.mxu0
    %250 = vmatpush.bf16.msra.mxu0 0
    %251 = vmatpush.bf16.msra.mxu0 0
    %252 = vmatpush.bf16.msra.mxu0 0
    %253 = vmatpush.bf16.msra.mxu0 0
    %254 = vmatpush.bf16.msra.mxu0 0
    %255 = vmatpush.bf16.msra.mxu0 0
    %256 = vmatpush.bf16.msra.mxu0 %v153
    %257 = vmatpush.bf16.msra.mxu0 %v146
    %258 = vmatmul.bf16.gmra.mxu0 %v170
    %v259 = vpop.f32.mrf.mxu0
    %v260 = vadd.f32 0.0, %v259
    %v261 = vpop.f32.mrf.mxu0
    %262 = vdwg.mxu0
    %v263 = vadd.f32 %v73, %v182
    %v264 = vadd.f32 %v74, %v195
    %v265 = vadd.f32 %v75, %v208
    %v266 = vadd.f32 %v76, %v221
    %v267 = vadd.f32 %v77, %v234
    %v268 = vadd.f32 %v78, %v247
    %v269 = vadd.f32 %v79, %v260
    %270 = vst [vmem:[#allocation2] sm:$0xff] %v263
    %271 = vst [vmem:[#allocation2 + $0x8] sm:$0xff] %v264
    %272 = vst [vmem:[#allocation2 + $0x10] sm:$0xff] %v265
    %273 = vst [vmem:[#allocation2 + $0x18] sm:$0xff] %v266
    %274 = vst [vmem:[#allocation2 + $0x20] sm:$0xff] %v267
    %275 = vst [vmem:[#allocation2 + $0x28] sm:$0xff] %v268
    %vm276 = vcmask 130048
    %277 = vst.msk [vmem:[#allocation2 + $0x30] sm:$0xff] %vm276, %v269
    // Predicated region
    $region30: #{tpu_custom_call.1} parent=1 // pred_check
      %p278 = pneg %p59
    $region31: #{tpu_custom_call.1} parent=1 // pred_check_branch
      %280 = sbr.rel (%p278) target = $region33
    $region32: #{tpu_custom_call.1} parent=1 // pred_region
      %v281 = vld [vmem:[#allocation2] sm:$0xff]
      %v282 = vld [vmem:[#allocation2 + $0x8] sm:$0xff]
      %v283 = vld [vmem:[#allocation2 + $0x10] sm:$0xff]
      %v284 = vld [vmem:[#allocation2 + $0x18] sm:$0xff]
      %v285 = vld [vmem:[#allocation2 + $0x20] sm:$0xff]
      %v286 = vld [vmem:[#allocation2 + $0x28] sm:$0xff]
      %v287 = vld [vmem:[#allocation2 + $0x30] sm:$0xff]
      %v288 = vld [vmem:[#allocation8] sm:$0x7f]
      %v290 = vperm.slane %v288, 0
      %v291 = vperm.slane %v288, 1
      %v292 = vperm.slane %v288, 2
      %v293 = vperm.slane %v288, 3
      %v294 = vperm.slane %v288, 4
      %v295 = vperm.slane %v288, 5
      %v296 = vperm.slane %v288, 6
      %v304 = vadd.f32 %v281, %v290
      %v305 = vadd.f32 %v282, %v291
      %v306 = vadd.f32 %v283, %v292
      %v307 = vadd.f32 %v284, %v293
      %v308 = vadd.f32 %v285, %v294
      %v309 = vadd.f32 %v286, %v295
      %v310 = vadd.f32 %v287, %v296
      %v311 = vxor.u32 %v304, 2147483648
      %v312 = vxor.u32 %v305, 2147483648
      %v313 = vxor.u32 %v306, 2147483648
      %v314 = vxor.u32 %v307, 2147483648
      %v315 = vxor.u32 %v308, 2147483648
      %v316 = vxor.u32 %v309, 2147483648
      %v317 = vxor.u32 %v310, 2147483648
      %v318 = vmul.f32 %v311, 1.442695
      %v319 = vpow.pop %v318
      %v320 = vmul.f32 %v312, 1.442695
      %v321 = vpow.pop %v320
      %v322 = vmul.f32 %v313, 1.442695
      %v323 = vpow.pop %v322
      %v324 = vmul.f32 %v314, 1.442695
      %v325 = vpow.pop %v324
      %v326 = vmul.f32 %v315, 1.442695
      %v327 = vpow.pop %v326
      %v328 = vmul.f32 %v316, 1.442695
      %v329 = vpow.pop %v328
      %v330 = vmul.f32 %v317, 1.442695
      %v331 = vpow.pop %v330
      %v332 = vadd.f32 %v319, 1.0
      %v333 = vadd.f32 %v321, 1.0
      %v334 = vadd.f32 %v323, 1.0
      %v335 = vadd.f32 %v325, 1.0
      %v336 = vadd.f32 %v327, 1.0
      %v337 = vadd.f32 %v329, 1.0
      %v338 = vadd.f32 %v331, 1.0
      %v339 = vrcp.pop %v332
      %v340 = vmul.f32 %v332, %v339
      %v341 = vsub.f32 1.0, %v340
      %v342 = vmul.f32 %v339, %v341
      %v343 = vadd.f32 %v339, %v342
      %vm344 = vweird.f32 %v332
      %vm345 = vweird.f32 %v339
      %vm346 = vmor %vm344, %vm345
      %v347 = vsel %vm346, %v339, %v343
      %v348 = vand.u32 2147483647, %v332
      %vm349 = vcmp.eq.f32.partialorder %v348, 8.507059e+37
      %v350 = vand.u32 %v332, 2147483648
      %v351 = vor.u32 1.1754944e-38, %v350
      %v352 = vsel %vm349, %v351, %v347
      %v353 = vmul.f32 1.0, %v352
      %v354 = vrcp.pop %v333
      %v355 = vmul.f32 %v333, %v354
      %v356 = vsub.f32 1.0, %v355
      %v357 = vmul.f32 %v354, %v356
      %v358 = vadd.f32 %v354, %v357
      %vm359 = vweird.f32 %v333
      %vm360 = vweird.f32 %v354
      %vm361 = vmor %vm359, %vm360
      %v362 = vsel %vm361, %v354, %v358
      %v363 = vand.u32 2147483647, %v333
      %vm364 = vcmp.eq.f32.partialorder %v363, 8.507059e+37
      %v365 = vand.u32 %v333, 2147483648
      %v366 = vor.u32 1.1754944e-38, %v365
      %v367 = vsel %vm364, %v366, %v362
      %v368 = vmul.f32 1.0, %v367
      %v369 = vrcp.pop %v334
      %v370 = vmul.f32 %v334, %v369
      %v371 = vsub.f32 1.0, %v370
      %v372 = vmul.f32 %v369, %v371
      %v373 = vadd.f32 %v369, %v372
      %vm374 = vweird.f32 %v334
      %vm375 = vweird.f32 %v369
      %vm376 = vmor %vm374, %vm375
      %v377 = vsel %vm376, %v369, %v373
      %v378 = vand.u32 2147483647, %v334
      %vm379 = vcmp.eq.f32.partialorder %v378, 8.507059e+37
      %v380 = vand.u32 %v334, 2147483648
      %v381 = vor.u32 1.1754944e-38, %v380
      %v382 = vsel %vm379, %v381, %v377
      %v383 = vmul.f32 1.0, %v382
      %v384 = vrcp.pop %v335
      %v385 = vmul.f32 %v335, %v384
      %v386 = vsub.f32 1.0, %v385
      %v387 = vmul.f32 %v384, %v386
      %v388 = vadd.f32 %v384, %v387
      %vm389 = vweird.f32 %v335
      %vm390 = vweird.f32 %v384
      %vm391 = vmor %vm389, %vm390
      %v392 = vsel %vm391, %v384, %v388
      %v393 = vand.u32 2147483647, %v335
      %vm394 = vcmp.eq.f32.partialorder %v393, 8.507059e+37
      %v395 = vand.u32 %v335, 2147483648
      %v396 = vor.u32 1.1754944e-38, %v395
      %v397 = vsel %vm394, %v396, %v392
      %v398 = vmul.f32 1.0, %v397
      %v399 = vrcp.pop %v336
      %v400 = vmul.f32 %v336, %v399
      %v401 = vsub.f32 1.0, %v400
      %v402 = vmul.f32 %v399, %v401
      %v403 = vadd.f32 %v399, %v402
      %vm404 = vweird.f32 %v336
      %vm405 = vweird.f32 %v399
      %vm406 = vmor %vm404, %vm405
      %v407 = vsel %vm406, %v399, %v403
      %v408 = vand.u32 2147483647, %v336
      %vm409 = vcmp.eq.f32.partialorder %v408, 8.507059e+37
      %v410 = vand.u32 %v336, 2147483648
      %v411 = vor.u32 1.1754944e-38, %v410
      %v412 = vsel %vm409, %v411, %v407
      %v413 = vmul.f32 1.0, %v412
      %v414 = vrcp.pop %v337
      %v415 = vmul.f32 %v337, %v414
      %v416 = vsub.f32 1.0, %v415
      %v417 = vmul.f32 %v414, %v416
      %v418 = vadd.f32 %v414, %v417
      %vm419 = vweird.f32 %v337
      %vm420 = vweird.f32 %v414
      %vm421 = vmor %vm419, %vm420
      %v422 = vsel %vm421, %v414, %v418
      %v423 = vand.u32 2147483647, %v337
      %vm424 = vcmp.eq.f32.partialorder %v423, 8.507059e+37
      %v425 = vand.u32 %v337, 2147483648
      %v426 = vor.u32 1.1754944e-38, %v425
      %v427 = vsel %vm424, %v426, %v422
      %v428 = vmul.f32 1.0, %v427
      %v429 = vrcp.pop %v338
      %v430 = vmul.f32 %v338, %v429
      %v431 = vsub.f32 1.0, %v430
      %v432 = vmul.f32 %v429, %v431
      %v433 = vadd.f32 %v429, %v432
      %vm434 = vweird.f32 %v338
      %vm435 = vweird.f32 %v429
      %vm436 = vmor %vm434, %vm435
      %v437 = vsel %vm436, %v429, %v433
      %v438 = vand.u32 2147483647, %v338
      %vm439 = vcmp.eq.f32.partialorder %v438, 8.507059e+37
      %v440 = vand.u32 %v338, 2147483648
      %v441 = vor.u32 1.1754944e-38, %v440
      %v442 = vsel %vm439, %v441, %v437
      %v443 = vmul.f32 1.0, %v442
      %444 = vst [vmem:[#allocation9] sm:$0xff] %v353
      %445 = vst [vmem:[#allocation9 + $0x8] sm:$0xff] %v368
      %446 = vst [vmem:[#allocation9 + $0x10] sm:$0xff] %v383
      %447 = vst [vmem:[#allocation9 + $0x18] sm:$0xff] %v398
      %448 = vst [vmem:[#allocation9 + $0x20] sm:$0xff] %v413
      %449 = vst [vmem:[#allocation9 + $0x28] sm:$0xff] %v428
      %450 = vst.msk [vmem:[#allocation9 + $0x30] sm:$0xff] %vm276, %v443
    $region33: #{tpu_custom_call.1} parent=1 // pred_fallthru
      _
    // Predicated region
    $region34: #{tpu_custom_call.1} parent=1 // pred_check
      _
    $region35: #{tpu_custom_call.1} parent=1 // pred_check_branch
      %452 = sbr.rel (0) target = $region37
    $region36: #{tpu_custom_call.1} parent=1 // pred_region
      %454 = vsyncadd [#allocation5], 0
      %s456 = sshll.u32 [#allocation9], 4
      %s457 = int_to_ptr.vmem [resolvable:$true] %s456
      %s458 = sshll.u32 %s3, 4
      %s459 = int_to_ptr.hbm [resolvable:$true] %s458
      %461 = dma.vmem_to_hbm [thread:$0]  %s457, 896, %s459, [#allocation5]
    $region37: #{tpu_custom_call.1} parent=1 // pred_fallthru
      _
    // Predicated region
    $region38: #{tpu_custom_call.1} parent=1 // pred_check
      _
    $region39: #{tpu_custom_call.1} parent=1 // pred_check_branch
      %463 = sbr.rel (0) target = $region41
    $region40: #{tpu_custom_call.1} parent=1 // pred_region
      %465 = dma.done [#allocation5], 896
    $region41: #{tpu_custom_call.1} parent=1 // pred_fallthru
      _
    %466 = vsyncpa [#allocation4], 1
    %467 = vsyncpa [#allocation7], 1
    %468 = vsyncpa [#allocation5], 1

</llo_original>
